<compile_context>
chip_gen: v5e
topology: v5e:2x2
jax: 0.10.0
libtpu: 0.0.40
codegen_flags: <defaults>
</compile_context>

<pallas_src>
import functools

import jax
import jax.numpy as jnp
from jax.experimental import pallas as pl
from jax.experimental.pallas import tpu as pltpu


def _round_up(x, m):
    return (x + m - 1) // m * m


def _embed_mean_matmul_kernel(idx_ref, table_ref, o_ref, *, bag_len, inv_len):
    """One grid step = one (TB, E) batch tile.

    idx_ref   : (TB, L) int32 ids for this batch tile (VMEM).
    table_ref : (Vp, Ep) float32, whole padded table, resident across the grid.
    o_ref     : (TB, Ep) float32 output tile.
    """
    tb = o_ref.shape[0]
    vp = table_ref.shape[0]

    # Build the bag-count matrix C[b, v] = #{j : idx[b, j] == v}.
    col_ids = jax.lax.broadcasted_iota(jnp.int32, (tb, vp), dimension=1)
    counts = jnp.zeros((tb, vp), jnp.float32)
    for j in range(bag_len):  # static, small bag length
        counts = counts + (col_ids == idx_ref[:, j : j + 1]).astype(jnp.float32)

    # Mean pool = (C @ table) / L on the MXU with f32 accumulation.
    pooled = jnp.dot(counts, table_ref[...], preferred_element_type=jnp.float32)
    o_ref[...] = (pooled * inv_len).astype(o_ref.dtype)


def embedding_mean_pool(indices, table):
    """EmbeddingUnitLayer.forward(X, meaning=True).

    indices: (B, L) integer ids; table: (V, E) float32.
    Returns (B, E) float32 = mean over L of table[indices].
    """
    B, L = indices.shape
    V, E = table.shape
    indices = indices.astype(jnp.int32)

    Vp = _round_up(V, 256)          # MXU-friendly contraction dim
    Ep = _round_up(E, 128)          # lane-dense output
    TB = min(128, _round_up(B, 8))  # batch tile: full sublanes, full-vreg adds
    Bp = _round_up(_round_up(B, 8), TB)

    # VMEM budget for the table-resident fast path (sized against v7x: 64 MiB
    # physical VMEM; v5e/v6e have 128 MiB, so this is conservative everywhere).
    table_bytes = Vp * Ep * 4
    counts_bytes = TB * Vp * 4
    tile_bytes = 2 * (TB * L * 4 + TB * Ep * 4)  # double-buffered idx/out tiles
    vmem_needed = table_bytes + counts_bytes + tile_bytes
    if vmem_needed > 24 * 1024 * 1024:
        # TODO(synk): manual DMA-gather kernel for huge tables; XLA gather for now.
        emb = jnp.take(table, indices, axis=0)
        return jnp.mean(emb, axis=1)

    table_p = jnp.zeros((Vp, Ep), jnp.float32).at[:V, :E].set(table)
    idx_p = jnp.zeros((Bp, L), jnp.int32).at[:B].set(indices)

    inv_len = 1.0 / float(L)  # shape-derived compile-time constant
    kernel = functools.partial(_embed_mean_matmul_kernel, bag_len=L, inv_len=inv_len)

    grid_spec = pltpu.PrefetchScalarGridSpec(
        num_scalar_prefetch=0,
        grid=(Bp // TB,),
        in_specs=[
            pl.BlockSpec((TB, L), lambda i: (i, 0)),    # ids for this batch tile
            pl.BlockSpec((Vp, Ep), lambda i: (0, 0)),   # whole table, VMEM-resident
        ],
        out_specs=pl.BlockSpec((TB, Ep), lambda i: (i, 0)),
    )

    cost = pl.CostEstimate(
        flops=2 * Bp * Vp * Ep + Bp * L * Vp,
        transcendentals=0,
        bytes_accessed=table_bytes + Bp * L * 4 + Bp * Ep * 4,
    )

    vmem_limit = int(min(max(2 * vmem_needed, 32 << 20), 48 << 20))

    out = pl.pallas_call(
        kernel,
        grid_spec=grid_spec,
        out_shape=jax.ShapeDtypeStruct((Bp, Ep), jnp.float32),
        compiler_params=pltpu.CompilerParams(
            dimension_semantics=("parallel",),
            vmem_limit_bytes=vmem_limit,
        ),
        cost_estimate=cost,
    )(idx_p, table_p)

    return out[:B, :E]


# ----------------------------- EmbeddingLayer plumbing -----------------------------

def init_embedding_layer(features, embedding_size, key):
    """Mirror of EmbeddingLayer.__init__: one table per non-shared feature,
    initialized with normal(std=1e-4)."""
    tables = {}
    for name, feature in features.items():
        if feature["shared_embed_name"] is not None:
            continue
        key, sub = jax.random.split(key)
        tables[name] = 1e-4 * jax.random.normal(
            sub, (len(feature["vocab"]), embedding_size), dtype=jnp.float32
        )
    return tables


def embedding_layer_forward(features, tables, inputs):
    """Mirror of EmbeddingLayer.forward(**kwargs): dict of mean-pooled embeddings."""
    outputs = {}
    for name, feature in features.items():
        table_name = feature["shared_embed_name"] or name
        outputs[name] = embedding_mean_pool(inputs[name], tables[table_name])
    return outputs


def reference_forward(features, tables, inputs):
    out = {}
    for name, feature in features.items():
        table_name = feature["shared_embed_name"] or name
        emb = jnp.take(tables[table_name], inputs[name], axis=0)  # (B, L, E)
        out[name] = jnp.mean(emb, axis=1)
    return out


if __name__ == "__main__":
    key = jax.random.PRNGKey(0)

    embedding_size = 128   # lane-dense output (multiple of 128)
    batch = 8

    # Small feature config exercising both own-table and shared-embedding paths.
    features = {
        "user_id":      {"vocab": list(range(1000)), "shared_embed_name": None},
        "item_id":      {"vocab": list(range(600)),  "shared_embed_name": None},
        "item_history": {"vocab": list(range(600)),  "shared_embed_name": "item_id"},
    }
    bag_lengths = {"user_id": 1, "item_id": 1, "item_history": 8}

    key, k_tables = jax.random.split(key)
    tables = init_embedding_layer(features, embedding_size, k_tables)

    inputs = {}
    for name, feature in features.items():
        vocab_owner = feature["shared_embed_name"] or name
        vsize = len(features[vocab_owner]["vocab"])
        key, sub = jax.random.split(key)
        inputs[name] = jax.random.randint(
            sub, (batch, bag_lengths[name]), 0, vsize, dtype=jnp.int32
        )

    outs = embedding_layer_forward(features, tables, inputs)
    outs = jax.block_until_ready(outs)

    refs = reference_forward(features, tables, inputs)
    for name in features:
        assert outs[name].shape == (batch, embedding_size)
        assert jnp.allclose(outs[name], refs[name], atol=1e-6, rtol=1e-5), (
            f"mismatch vs reference for feature {name}"
        )

    print("KERNEL_OK")
</pallas_src>

<mosaic_0001>
module attributes {stable_mosaic.version = 11 : i64} {
  func.func @_embed_mean_matmul_kernel(%arg0: i32, %arg1: memref<8x1xi32, #tpu.memory_space<vmem>>, %arg2: memref<1024x128xf32, #tpu.memory_space<vmem>>, %arg3: memref<8x128xf32, #tpu.memory_space<vmem>>) attributes {dimension_semantics = [#tpu.dimension_semantics<parallel>], iteration_bounds = array<i64: 1>, scalar_prefetch = 0 : i64, scratch_operands = 0 : i64, tpu.core_type = #tpu.core_type<tc>, window_params = [{transform_indices = @transform_0, window_bounds = array<i64: 8, 1>}, {pipeline_mode = #tpu.pipeline_mode<synchronous>, transform_indices = @transform_1, window_bounds = array<i64: 1024, 128>}, {transform_indices = @transform_2, window_bounds = array<i64: 8, 128>}]} {
    %0 = tpu.iota {dimensions = array<i32: 1>} : vector<8x1024xi32>
    %cst = arith.constant 0.000000e+00 : f32
    %1 = vector.broadcast %cst : f32 to vector<8x1024xf32>
    %c0 = arith.constant 0 : index
    %c0_0 = arith.constant 0 : index
    %2 = vector.load %arg1[%c0, %c0_0] : memref<8x1xi32, #tpu.memory_space<vmem>>, vector<8x1xi32>
    %3 = vector.broadcast %2 : vector<8x1xi32> to vector<8x1024xi32>
    %4 = arith.cmpi eq, %0, %3 : vector<8x1024xi32>
    %5 = arith.extui %4 : vector<8x1024xi1> to vector<8x1024xi32>
    %6 = arith.sitofp %5 : vector<8x1024xi32> to vector<8x1024xf32>
    %7 = arith.addf %1, %6 : vector<8x1024xf32>
    %c0_1 = arith.constant 0 : index
    %c0_2 = arith.constant 0 : index
    %8 = vector.load %arg2[%c0_1, %c0_2] : memref<1024x128xf32, #tpu.memory_space<vmem>>, vector<1024x128xf32>
    %cst_3 = arith.constant dense<0.000000e+00> : vector<8x128xf32>
    %9 = tpu.matmul %7, %8, %cst_3 {dimension_numbers = #tpu.dot_dimension_numbers<[1], [0], [0], [1], [0, 0, 1, 1], [], []>} : vector<8x1024xf32>, vector<1024x128xf32>, vector<8x128xf32> -> vector<8x128xf32>
    %cst_4 = arith.constant 1.000000e+00 : f32
    %10 = vector.broadcast %cst_4 : f32 to vector<8x128xf32>
    %11 = arith.mulf %9, %10 : vector<8x128xf32>
    %c0_5 = arith.constant 0 : index
    %c0_6 = arith.constant 0 : index
    %12 = vector.load %arg3[%c0_5, %c0_6] : memref<8x128xf32, #tpu.memory_space<vmem>>, vector<8x128xf32>
    tpu.vector_store %arg3[%c0_5, %c0_6], %11 {strides = array<i32>} : memref<8x128xf32, #tpu.memory_space<vmem>>, vector<8x128xf32>,
    return
  }
  func.func @transform_0(%arg0: i32) -> (i32, i32) {
    %c0_i32 = arith.constant 0 : i32
    %c0_i32_0 = arith.constant 0 : i32
    return %arg0, %c0_i32 : i32, i32
  }
  func.func @transform_1(%arg0: i32) -> (i32, i32) {
    %c0_i32 = arith.constant 0 : i32
    %c0_i32_0 = arith.constant 0 : i32
    %c0_i32_1 = arith.constant 0 : i32
    return %c0_i32, %c0_i32_0 : i32, i32
  }
  func.func @transform_2(%arg0: i32) -> (i32, i32) {
    %c0_i32 = arith.constant 0 : i32
    %c0_i32_0 = arith.constant 0 : i32
    return %arg0, %c0_i32 : i32, i32
  }
}

</mosaic_0001>

<llo_original>
// kernel: tpu_custom_call.1
$region0: #{tpu_custom_call.1}
  #allocation0 [shape = 'u32[]', space=smem, size = 0x4, offset = 0x4, fixed_abs, tag = 'smem constant byte address 0x4 - core index']
  #allocation1 [shape = 'u32[72,128]{1,0:T(1,128)}', space=vmem, size = 0x9000, scoped, tag = 'internal scratch']
  %s0 = inlined_call_operand.vmem [shape: s32[8,1], index: 0, kind: input, shape index: {}]
  %s1 = inlined_call_operand.hbm [shape: f32[1024,128], index: 1, kind: input, shape index: {}]
  %s2 = inlined_call_operand.hbm [shape: f32[8,128], index: 2, kind: output, shape index: {}]
  %s3 = sld [smem:[#allocation0]]
  $region22: #{tpu_custom_call.1} parent=0
    _
  %s5 = ssub.s32 1, %s3
  %s6 = scalar_select 0, %s5, %s3
  $region1: #{tpu_custom_call.1} parent=0
    #allocation2 [shape = 'u8[524288]{0}', space=vmem, size = 0x80000, scoped, tag = 'input window, operand 1, single buffered']
    #allocation3 [shape = 's32[1]{0}', space=sflag, size = 0x4, scoped, tag = 'scoped memory for tpu_custom_call.1']
    #allocation4 [shape = 's32[1]{0}', space=sflag, size = 0x4, scoped, tag = 'scoped memory for tpu_custom_call.1']
    #allocation5 [shape = 'u8[4096]{0}', space=vmem, size = 0x1000, scoped, tag = 'output window, operand 0, single buffered']
    %7 = vsyncpa [#allocation3], 0
    %8 = vsyncpa [#allocation4], 0
    // Predicated region
    $region2: #{tpu_custom_call.1} parent=1 // pred_check
      _
    $region3: #{tpu_custom_call.1} parent=1 // pred_check_branch
      %10 = sbr.rel (0) target = $region5
    $region4: #{tpu_custom_call.1} parent=1 // pred_region
      _
    $region5: #{tpu_custom_call.1} parent=1 // pred_fallthru
      _
    // Predicated region
    $region6: #{tpu_custom_call.1} parent=1 // pred_check
      _
    $region7: #{tpu_custom_call.1} parent=1 // pred_check_branch
      %12 = sbr.rel (0) target = $region9
    $region8: #{tpu_custom_call.1} parent=1 // pred_region
      %14 = vsyncadd [#allocation3], 0
      %s15 = sshll.u32 %s1, 4
      %s16 = int_to_ptr.hbm [resolvable:$true] %s15
      %s17 = sshll.u32 [#allocation2], 4
      %s18 = int_to_ptr.vmem [resolvable:$true] %s17
      %23 = dma.hbm_to_vmem [thread:$0]  %s16, 16384, %s18, [#allocation3], 128, 128, 8
    $region9: #{tpu_custom_call.1} parent=1 // pred_fallthru
      _
    // Predicated region
    $region10: #{tpu_custom_call.1} parent=1 // pred_check
      _
    $region11: #{tpu_custom_call.1} parent=1 // pred_check_branch
      %25 = sbr.rel (0) target = $region13
    $region12: #{tpu_custom_call.1} parent=1 // pred_region
      %27 = dma.done [#allocation3], 16384
    $region13: #{tpu_custom_call.1} parent=1 // pred_fallthru
      _
    %v28 = vlaneseq
    %v29 = vand.u32 %v28, 127
    %v30 = vadd.s32 %v29, 128
    %v31 = vadd.s32 %v29, 256
    %v32 = vadd.s32 %v29, 384
    %v33 = vadd.s32 %v29, 512
    %v34 = vadd.s32 %v29, 640
    %v35 = vadd.s32 %v29, 768
    %v36 = vadd.s32 %v29, 896
    %v37 = vld [vmem:[%s0] sm:$0xff]
    %38 = vset.pattern.permute.xlu0 0
    %39 = vperm.xlu0 %38, %v37
    %v40 = vpop.permute.xlu0 %39
    %vm41 = vcmp.eq.s32.totalorder %v29, %v40
    %vm42 = vcmp.eq.s32.totalorder %v30, %v40
    %vm43 = vcmp.eq.s32.totalorder %v31, %v40
    %vm44 = vcmp.eq.s32.totalorder %v32, %v40
    %vm45 = vcmp.eq.s32.totalorder %v33, %v40
    %vm46 = vcmp.eq.s32.totalorder %v34, %v40
    %vm47 = vcmp.eq.s32.totalorder %v35, %v40
    %vm48 = vcmp.eq.s32.totalorder %v36, %v40
    %v49 = vsel %vm41, 1, 0
    %v50 = vsel %vm42, 1, 0
    %v51 = vsel %vm43, 1, 0
    %v52 = vsel %vm44, 1, 0
    %v53 = vsel %vm45, 1, 0
    %v54 = vsel %vm46, 1, 0
    %v55 = vsel %vm47, 1, 0
    %v56 = vsel %vm48, 1, 0
    %v57 = vcvt.s32.f32 %v49
    %v58 = vcvt.s32.f32 %v50
    %v59 = vcvt.s32.f32 %v51
    %v60 = vcvt.s32.f32 %v52
    %v61 = vcvt.s32.f32 %v53
    %v62 = vcvt.s32.f32 %v54
    %v63 = vcvt.s32.f32 %v55
    %v64 = vcvt.s32.f32 %v56
    %v65 = vadd.f32 %v57, 0.0
    %v66 = vadd.f32 %v58, 0.0
    %v67 = vadd.f32 %v59, 0.0
    %v68 = vadd.f32 %v60, 0.0
    %v69 = vadd.f32 %v61, 0.0
    %v70 = vadd.f32 %v62, 0.0
    %v71 = vadd.f32 %v63, 0.0
    %v72 = vadd.f32 %v64, 0.0
    %v73 = vld [vmem:[#allocation2] sm:$0xff]
    %v74 = vld [vmem:[#allocation2 + $0x8] sm:$0xff]
    %v75 = vld [vmem:[#allocation2 + $0x10] sm:$0xff]
    %v76 = vld [vmem:[#allocation2 + $0x18] sm:$0xff]
    %v77 = vld [vmem:[#allocation2 + $0x20] sm:$0xff]
    %v78 = vld [vmem:[#allocation2 + $0x28] sm:$0xff]
    %v79 = vld [vmem:[#allocation2 + $0x30] sm:$0xff]
    %v80 = vld [vmem:[#allocation2 + $0x38] sm:$0xff]
    %v81 = vld [vmem:[#allocation2 + $0x40] sm:$0xff]
    %v82 = vld [vmem:[#allocation2 + $0x48] sm:$0xff]
    %v83 = vld [vmem:[#allocation2 + $0x50] sm:$0xff]
    %v84 = vld [vmem:[#allocation2 + $0x58] sm:$0xff]
    %v85 = vld [vmem:[#allocation2 + $0x60] sm:$0xff]
    %v86 = vld [vmem:[#allocation2 + $0x68] sm:$0xff]
    %v87 = vld [vmem:[#allocation2 + $0x70] sm:$0xff]
    %v88 = vld [vmem:[#allocation2 + $0x78] sm:$0xff]
    %v89 = vld [vmem:[#allocation2 + $0x80] sm:$0xff]
    %v90 = vld [vmem:[#allocation2 + $0x88] sm:$0xff]
    %v91 = vld [vmem:[#allocation2 + $0x90] sm:$0xff]
    %v92 = vld [vmem:[#allocation2 + $0x98] sm:$0xff]
    %v93 = vld [vmem:[#allocation2 + $0xa0] sm:$0xff]
    %v94 = vld [vmem:[#allocation2 + $0xa8] sm:$0xff]
    %v95 = vld [vmem:[#allocation2 + $0xb0] sm:$0xff]
    %v96 = vld [vmem:[#allocation2 + $0xb8] sm:$0xff]
    %v97 = vld [vmem:[#allocation2 + $0xc0] sm:$0xff]
    %v98 = vld [vmem:[#allocation2 + $0xc8] sm:$0xff]
    %v99 = vld [vmem:[#allocation2 + $0xd0] sm:$0xff]
    %v100 = vld [vmem:[#allocation2 + $0xd8] sm:$0xff]
    %v101 = vld [vmem:[#allocation2 + $0xe0] sm:$0xff]
    %v102 = vld [vmem:[#allocation2 + $0xe8] sm:$0xff]
    %v103 = vld [vmem:[#allocation2 + $0xf0] sm:$0xff]
    %v104 = vld [vmem:[#allocation2 + $0xf8] sm:$0xff]
    %v105 = vld [vmem:[#allocation2 + $0x100] sm:$0xff]
    %v106 = vld [vmem:[#allocation2 + $0x108] sm:$0xff]
    %v107 = vld [vmem:[#allocation2 + $0x110] sm:$0xff]
    %v108 = vld [vmem:[#allocation2 + $0x118] sm:$0xff]
    %v109 = vld [vmem:[#allocation2 + $0x120] sm:$0xff]
    %v110 = vld [vmem:[#allocation2 + $0x128] sm:$0xff]
    %v111 = vld [vmem:[#allocation2 + $0x130] sm:$0xff]
    %v112 = vld [vmem:[#allocation2 + $0x138] sm:$0xff]
    %v113 = vld [vmem:[#allocation2 + $0x140] sm:$0xff]
    %v114 = vld [vmem:[#allocation2 + $0x148] sm:$0xff]
    %v115 = vld [vmem:[#allocation2 + $0x150] sm:$0xff]
    %v116 = vld [vmem:[#allocation2 + $0x158] sm:$0xff]
    %v117 = vld [vmem:[#allocation2 + $0x160] sm:$0xff]
    %v118 = vld [vmem:[#allocation2 + $0x168] sm:$0xff]
    %v119 = vld [vmem:[#allocation2 + $0x170] sm:$0xff]
    %v120 = vld [vmem:[#allocation2 + $0x178] sm:$0xff]
    %v121 = vld [vmem:[#allocation2 + $0x180] sm:$0xff]
    %v122 = vld [vmem:[#allocation2 + $0x188] sm:$0xff]
    %v123 = vld [vmem:[#allocation2 + $0x190] sm:$0xff]
    %v124 = vld [vmem:[#allocation2 + $0x198] sm:$0xff]
    %v125 = vld [vmem:[#allocation2 + $0x1a0] sm:$0xff]
    %v126 = vld [vmem:[#allocation2 + $0x1a8] sm:$0xff]
    %v127 = vld [vmem:[#allocation2 + $0x1b0] sm:$0xff]
    %v128 = vld [vmem:[#allocation2 + $0x1b8] sm:$0xff]
    %v129 = vld [vmem:[#allocation2 + $0x1c0] sm:$0xff]
    %v130 = vld [vmem:[#allocation2 + $0x1c8] sm:$0xff]
    %v131 = vld [vmem:[#allocation2 + $0x1d0] sm:$0xff]
    %v132 = vld [vmem:[#allocation2 + $0x1d8] sm:$0xff]
    %v133 = vld [vmem:[#allocation2 + $0x1e0] sm:$0xff]
    %v134 = vld [vmem:[#allocation2 + $0x1e8] sm:$0xff]
    %v135 = vld [vmem:[#allocation2 + $0x1f0] sm:$0xff]
    %v136 = vld [vmem:[#allocation2 + $0x1f8] sm:$0xff]
    %v137 = vld [vmem:[#allocation2 + $0x200] sm:$0xff]
    %v138 = vld [vmem:[#allocation2 + $0x208] sm:$0xff]
    %v139 = vld [vmem:[#allocation2 + $0x210] sm:$0xff]
    %v140 = vld [vmem:[#allocation2 + $0x218] sm:$0xff]
    %v141 = vld [vmem:[#allocation2 + $0x220] sm:$0xff]
    %v142 = vld [vmem:[#allocation2 + $0x228] sm:$0xff]
    %v143 = vld [vmem:[#allocation2 + $0x230] sm:$0xff]
    %v144 = vld [vmem:[#allocation2 + $0x238] sm:$0xff]
    %v145 = vld [vmem:[#allocation2 + $0x240] sm:$0xff]
    %v146 = vld [vmem:[#allocation2 + $0x248] sm:$0xff]
    %v147 = vld [vmem:[#allocation2 + $0x250] sm:$0xff]
    %v148 = vld [vmem:[#allocation2 + $0x258] sm:$0xff]
    %v149 = vld [vmem:[#allocation2 + $0x260] sm:$0xff]
    %v150 = vld [vmem:[#allocation2 + $0x268] sm:$0xff]
    %v151 = vld [vmem:[#allocation2 + $0x270] sm:$0xff]
    %v152 = vld [vmem:[#allocation2 + $0x278] sm:$0xff]
    %v153 = vld [vmem:[#allocation2 + $0x280] sm:$0xff]
    %v154 = vld [vmem:[#allocation2 + $0x288] sm:$0xff]
    %v155 = vld [vmem:[#allocation2 + $0x290] sm:$0xff]
    %v156 = vld [vmem:[#allocation2 + $0x298] sm:$0xff]
    %v157 = vld [vmem:[#allocation2 + $0x2a0] sm:$0xff]
    %v158 = vld [vmem:[#allocation2 + $0x2a8] sm:$0xff]
    %v159 = vld [vmem:[#allocation2 + $0x2b0] sm:$0xff]
    %v160 = vld [vmem:[#allocation2 + $0x2b8] sm:$0xff]
    %v161 = vld [vmem:[#allocation2 + $0x2c0] sm:$0xff]
    %v162 = vld [vmem:[#allocation2 + $0x2c8] sm:$0xff]
    %v163 = vld [vmem:[#allocation2 + $0x2d0] sm:$0xff]
    %v164 = vld [vmem:[#allocation2 + $0x2d8] sm:$0xff]
    %v165 = vld [vmem:[#allocation2 + $0x2e0] sm:$0xff]
    %v166 = vld [vmem:[#allocation2 + $0x2e8] sm:$0xff]
    %v167 = vld [vmem:[#allocation2 + $0x2f0] sm:$0xff]
    %v168 = vld [vmem:[#allocation2 + $0x2f8] sm:$0xff]
    %v169 = vld [vmem:[#allocation2 + $0x300] sm:$0xff]
    %v170 = vld [vmem:[#allocation2 + $0x308] sm:$0xff]
    %v171 = vld [vmem:[#allocation2 + $0x310] sm:$0xff]
    %v172 = vld [vmem:[#allocation2 + $0x318] sm:$0xff]
    %v173 = vld [vmem:[#allocation2 + $0x320] sm:$0xff]
    %v174 = vld [vmem:[#allocation2 + $0x328] sm:$0xff]
    %v175 = vld [vmem:[#allocation2 + $0x330] sm:$0xff]
    %v176 = vld [vmem:[#allocation2 + $0x338] sm:$0xff]
    %v177 = vld [vmem:[#allocation2 + $0x340] sm:$0xff]
    %v178 = vld [vmem:[#allocation2 + $0x348] sm:$0xff]
    %v179 = vld [vmem:[#allocation2 + $0x350] sm:$0xff]
    %v180 = vld [vmem:[#allocation2 + $0x358] sm:$0xff]
    %v181 = vld [vmem:[#allocation2 + $0x360] sm:$0xff]
    %v182 = vld [vmem:[#allocation2 + $0x368] sm:$0xff]
    %v183 = vld [vmem:[#allocation2 + $0x370] sm:$0xff]
    %v184 = vld [vmem:[#allocation2 + $0x378] sm:$0xff]
    %v185 = vld [vmem:[#allocation2 + $0x380] sm:$0xff]
    %v186 = vld [vmem:[#allocation2 + $0x388] sm:$0xff]
    %v187 = vld [vmem:[#allocation2 + $0x390] sm:$0xff]
    %v188 = vld [vmem:[#allocation2 + $0x398] sm:$0xff]
    %v189 = vld [vmem:[#allocation2 + $0x3a0] sm:$0xff]
    %v190 = vld [vmem:[#allocation2 + $0x3a8] sm:$0xff]
    %v191 = vld [vmem:[#allocation2 + $0x3b0] sm:$0xff]
    %v192 = vld [vmem:[#allocation2 + $0x3b8] sm:$0xff]
    %v193 = vld [vmem:[#allocation2 + $0x3c0] sm:$0xff]
    %v194 = vld [vmem:[#allocation2 + $0x3c8] sm:$0xff]
    %v195 = vld [vmem:[#allocation2 + $0x3d0] sm:$0xff]
    %v196 = vld [vmem:[#allocation2 + $0x3d8] sm:$0xff]
    %v197 = vld [vmem:[#allocation2 + $0x3e0] sm:$0xff]
    %v198 = vld [vmem:[#allocation2 + $0x3e8] sm:$0xff]
    %v199 = vld [vmem:[#allocation2 + $0x3f0] sm:$0xff]
    %v200 = vld [vmem:[#allocation2 + $0x3f8] sm:$0xff]
    %201 = vmatpush.msra.mxu0 %v88
    %202 = vmatpush.msra.mxu0 %v87
    %203 = vmatpush.msra.mxu0 %v86
    %204 = vmatpush.msra.mxu0 %v85
    %205 = vmatpush.msra.mxu0 %v84
    %206 = vmatpush.msra.mxu0 %v83
    %207 = vmatpush.msra.mxu0 %v82
    %208 = vmatpush.msra.mxu0 %v81
    %209 = vmatpush.msra.mxu0 %v80
    %210 = vmatpush.msra.mxu0 %v79
    %211 = vmatpush.msra.mxu0 %v78
    %212 = vmatpush.msra.mxu0 %v77
    %213 = vmatpush.msra.mxu0 %v76
    %214 = vmatpush.msra.mxu0 %v75
    %215 = vmatpush.msra.mxu0 %v74
    %216 = vmatpush.msra.mxu0 %v73
    %217 = vmatmul.f32.gmra.mxu0 %v65
    %v218 = vpop.f32.mrf.mxu0
    %v219 = vadd.f32 0.0, %v218
    %220 = vdwg.mxu0
    %221 = vmatpush.msra.mxu0 %v104
    %222 = vmatpush.msra.mxu0 %v103
    %223 = vmatpush.msra.mxu0 %v102
    %224 = vmatpush.msra.mxu0 %v101
    %225 = vmatpush.msra.mxu0 %v100
    %226 = vmatpush.msra.mxu0 %v99
    %227 = vmatpush.msra.mxu0 %v98
    %228 = vmatpush.msra.mxu0 %v97
    %229 = vmatpush.msra.mxu0 %v96
    %230 = vmatpush.msra.mxu0 %v95
    %231 = vmatpush.msra.mxu0 %v94
    %232 = vmatpush.msra.mxu0 %v93
    %233 = vmatpush.msra.mxu0 %v92
    %234 = vmatpush.msra.mxu0 %v91
    %235 = vmatpush.msra.mxu0 %v90
    %236 = vmatpush.msra.mxu0 %v89
    %237 = vmatmul.f32.gmra.mxu0 %v66
    %v238 = vpop.f32.mrf.mxu0
    %v239 = vadd.f32 %v219, %v238
    %240 = vdwg.mxu0
    %241 = vmatpush.msra.mxu0 %v120
    %242 = vmatpush.msra.mxu0 %v119
    %243 = vmatpush.msra.mxu0 %v118
    %244 = vmatpush.msra.mxu0 %v117
    %245 = vmatpush.msra.mxu0 %v116
    %246 = vmatpush.msra.mxu0 %v115
    %247 = vmatpush.msra.mxu0 %v114
    %248 = vmatpush.msra.mxu0 %v113
    %249 = vmatpush.msra.mxu0 %v112
    %250 = vmatpush.msra.mxu0 %v111
    %251 = vmatpush.msra.mxu0 %v110
    %252 = vmatpush.msra.mxu0 %v109
    %253 = vmatpush.msra.mxu0 %v108
    %254 = vmatpush.msra.mxu0 %v107
    %255 = vmatpush.msra.mxu0 %v106
    %256 = vmatpush.msra.mxu0 %v105
    %257 = vmatmul.f32.gmra.mxu0 %v67
    %v258 = vpop.f32.mrf.mxu0
    %v259 = vadd.f32 %v239, %v258
    %260 = vdwg.mxu0
    %261 = vmatpush.msra.mxu0 %v136
    %262 = vmatpush.msra.mxu0 %v135
    %263 = vmatpush.msra.mxu0 %v134
    %264 = vmatpush.msra.mxu0 %v133
    %265 = vmatpush.msra.mxu0 %v132
    %266 = vmatpush.msra.mxu0 %v131
    %267 = vmatpush.msra.mxu0 %v130
    %268 = vmatpush.msra.mxu0 %v129
    %269 = vmatpush.msra.mxu0 %v128
    %270 = vmatpush.msra.mxu0 %v127
    %271 = vmatpush.msra.mxu0 %v126
    %272 = vmatpush.msra.mxu0 %v125
    %273 = vmatpush.msra.mxu0 %v124
    %274 = vmatpush.msra.mxu0 %v123
    %275 = vmatpush.msra.mxu0 %v122
    %276 = vmatpush.msra.mxu0 %v121
    %277 = vmatmul.f32.gmra.mxu0 %v68
    %v278 = vpop.f32.mrf.mxu0
    %v279 = vadd.f32 %v259, %v278
    %280 = vdwg.mxu0
    %281 = vmatpush.msra.mxu0 %v152
    %282 = vmatpush.msra.mxu0 %v151
    %283 = vmatpush.msra.mxu0 %v150
    %284 = vmatpush.msra.mxu0 %v149
    %285 = vmatpush.msra.mxu0 %v148
    %286 = vmatpush.msra.mxu0 %v147
    %287 = vmatpush.msra.mxu0 %v146
    %288 = vmatpush.msra.mxu0 %v145
    %289 = vmatpush.msra.mxu0 %v144
    %290 = vmatpush.msra.mxu0 %v143
    %291 = vmatpush.msra.mxu0 %v142
    %292 = vmatpush.msra.mxu0 %v141
    %293 = vmatpush.msra.mxu0 %v140
    %294 = vmatpush.msra.mxu0 %v139
    %295 = vmatpush.msra.mxu0 %v138
    %296 = vmatpush.msra.mxu0 %v137
    %297 = vmatmul.f32.gmra.mxu0 %v69
    %v298 = vpop.f32.mrf.mxu0
    %v299 = vadd.f32 %v279, %v298
    %300 = vdwg.mxu0
    %301 = vmatpush.msra.mxu0 %v168
    %302 = vmatpush.msra.mxu0 %v167
    %303 = vmatpush.msra.mxu0 %v166
    %304 = vmatpush.msra.mxu0 %v165
    %305 = vmatpush.msra.mxu0 %v164
    %306 = vmatpush.msra.mxu0 %v163
    %307 = vmatpush.msra.mxu0 %v162
    %308 = vmatpush.msra.mxu0 %v161
    %309 = vmatpush.msra.mxu0 %v160
    %310 = vmatpush.msra.mxu0 %v159
    %311 = vmatpush.msra.mxu0 %v158
    %312 = vmatpush.msra.mxu0 %v157
    %313 = vmatpush.msra.mxu0 %v156
    %314 = vmatpush.msra.mxu0 %v155
    %315 = vmatpush.msra.mxu0 %v154
    %316 = vmatpush.msra.mxu0 %v153
    %317 = vmatmul.f32.gmra.mxu0 %v70
    %v318 = vpop.f32.mrf.mxu0
    %v319 = vadd.f32 %v299, %v318
    %320 = vdwg.mxu0
    %321 = vmatpush.msra.mxu0 %v184
    %322 = vmatpush.msra.mxu0 %v183
    %323 = vmatpush.msra.mxu0 %v182
    %324 = vmatpush.msra.mxu0 %v181
    %325 = vmatpush.msra.mxu0 %v180
    %326 = vmatpush.msra.mxu0 %v179
    %327 = vmatpush.msra.mxu0 %v178
    %328 = vmatpush.msra.mxu0 %v177
    %329 = vmatpush.msra.mxu0 %v176
    %330 = vmatpush.msra.mxu0 %v175
    %331 = vmatpush.msra.mxu0 %v174
    %332 = vmatpush.msra.mxu0 %v173
    %333 = vmatpush.msra.mxu0 %v172
    %334 = vmatpush.msra.mxu0 %v171
    %335 = vmatpush.msra.mxu0 %v170
    %336 = vmatpush.msra.mxu0 %v169
    %337 = vmatmul.f32.gmra.mxu0 %v71
    %v338 = vpop.f32.mrf.mxu0
    %v339 = vadd.f32 %v319, %v338
    %340 = vdwg.mxu0
    %341 = vmatpush.msra.mxu0 %v200
    %342 = vmatpush.msra.mxu0 %v199
    %343 = vmatpush.msra.mxu0 %v198
    %344 = vmatpush.msra.mxu0 %v197
    %345 = vmatpush.msra.mxu0 %v196
    %346 = vmatpush.msra.mxu0 %v195
    %347 = vmatpush.msra.mxu0 %v194
    %348 = vmatpush.msra.mxu0 %v193
    %349 = vmatpush.msra.mxu0 %v192
    %350 = vmatpush.msra.mxu0 %v191
    %351 = vmatpush.msra.mxu0 %v190
    %352 = vmatpush.msra.mxu0 %v189
    %353 = vmatpush.msra.mxu0 %v188
    %354 = vmatpush.msra.mxu0 %v187
    %355 = vmatpush.msra.mxu0 %v186
    %356 = vmatpush.msra.mxu0 %v185
    %357 = vmatmul.f32.gmra.mxu0 %v72
    %v358 = vpop.f32.mrf.mxu0
    %v359 = vadd.f32 %v339, %v358
    %360 = vdwg.mxu0
    %361 = vst [vmem:[#allocation5] sm:$0xff] %v359
    // Predicated region
    $region14: #{tpu_custom_call.1} parent=1 // pred_check
      _
    $region15: #{tpu_custom_call.1} parent=1 // pred_check_branch
      %363 = sbr.rel (0) target = $region17
    $region16: #{tpu_custom_call.1} parent=1 // pred_region
      %365 = vsyncadd [#allocation4], 0
      %s367 = sshll.u32 [#allocation5], 4
      %s368 = int_to_ptr.vmem [resolvable:$true] %s367
      %s369 = sshll.u32 %s2, 4
      %s370 = int_to_ptr.hbm [resolvable:$true] %s369
      %372 = dma.vmem_to_hbm [thread:$0]  %s368, 128, %s370, [#allocation4]
    $region17: #{tpu_custom_call.1} parent=1 // pred_fallthru
      _
    // Predicated region
    $region18: #{tpu_custom_call.1} parent=1 // pred_check
      _
    $region19: #{tpu_custom_call.1} parent=1 // pred_check_branch
      %374 = sbr.rel (0) target = $region21
    $region20: #{tpu_custom_call.1} parent=1 // pred_region
      %376 = dma.done [#allocation4], 128
    $region21: #{tpu_custom_call.1} parent=1 // pred_fallthru
      _
    %377 = vsyncpa [#allocation3], 1
    %378 = vsyncpa [#allocation4], 1

</llo_original>
